<compile_context>
chip_gen: v6e
topology: v6e:2x2x1
jax: 0.10.0
libtpu: 0.0.40
codegen_flags: <defaults>
</compile_context>

<pallas_src>
import functools

import jax
import jax.numpy as jnp
from jax import lax
from jax.experimental import pallas as pl
from jax.experimental.pallas import tpu as pltpu


_SUBLANES = 8
_LANES = 128
_FAST_PATH_BYTES = 64 * 1024       # below this, a fused XLA reduce wins
_CHUNK_BYTES = 256 * 1024          # per-chunk f32 temp budget inside the kernel
_SMALL_BLOCK_BYTES = 256 * 1024    # below this (and many row tiles) -> Buffered(3)


def _round_up(x: int, m: int) -> int:
    return ((x + m - 1) // m) * m


def _tpu_info():
    """Returns (multi_tensorcore, vmem_capacity_bytes); conservative fallbacks."""
    kind = ""
    try:
        kind = jax.devices()[0].device_kind.lower()
    except Exception:
        pass
    if any(t in kind for t in ("v7", "tpu7")):
        multi_tc, cap = True, 64 * 2**20          # v7x: 2 TCs, 64 MiB VMEM / TC
    elif any(t in kind for t in ("v2", "v3")):
        multi_tc, cap = False, 16 * 2**20
    elif kind:
        multi_tc = any(t in kind for t in ("v4", "v5p"))   # megacore parts
        cap = 128 * 2**20                         # v4 / v5e / v5p / v6e
    else:
        multi_tc, cap = False, 64 * 2**20
    try:  # authoritative if available
        cap = int(pltpu.get_tpu_info().vmem_capacity_bytes)
    except Exception:
        pass
    return multi_tc, cap


def _pick_tile_d(d: int, itemsize: int, multi_tc: bool) -> int:
    """Feature tile.

    Single-TC parts (v5e/v6e): full D — contiguous DMA rows, fewest grid steps.
    Multi-TC parts (v7x): split D into >=2 lane-dense tiles (>=512 B contiguous
    per row) so the 'parallel' feature axis can shard across TensorCores.
    """
    if d % _LANES != 0 or not multi_tc:
        return d
    min_lanes = max(_LANES, _round_up(512 // itemsize, _LANES))
    for tiles in range(2, d // min_lanes + 1):     # fewest tiles => biggest tile_d
        td = d // tiles
        if d % tiles == 0 and td % _LANES == 0 and td >= min_lanes:
            return td
    return d


def _sum_pool_kernel(h_ref, o_ref, acc_ref, *, n_rows, tile_n, tile_d, chunk,
                     nt_per, may_be_partial, unroll):
    # Grid = (row-split ["parallel"], feature tiles ["parallel"],
    #         row tiles ["arbitrary", innermost]).
    s = pl.program_id(0)
    i = pl.program_id(2)

    @pl.when(i == 0)
    def _():
        acc_ref[...] = jnp.zeros_like(acc_ref)

    num_chunks = tile_n // chunk

    def add_chunk(k, valid):
        # `valid`: number of real rows in this tile (traced), or None if the
        # tile is known to be full.  Masking happens in the native dtype on a
        # small chunk, so garbage in the out-of-bounds region (even NaN) is
        # zeroed before it can reach the accumulator.
        off = pl.multiple_of(k * chunk, chunk)
        hc = h_ref[pl.ds(off, chunk), :]
        if valid is not None:
            rows = lax.broadcasted_iota(jnp.int32, (chunk, tile_d), 0)
            hc = jnp.where(rows < (valid - off), hc, 0)
        acc_ref[...] += jnp.sum(
            hc.astype(jnp.float32).reshape(chunk // _SUBLANES, _SUBLANES, tile_d),
            axis=0)

    def run(valid):
        def body(k, carry):
            add_chunk(k, valid)
            return carry
        lax.fori_loop(0, num_chunks, body, 0, unroll=unroll)

    if may_be_partial:
        r0 = (s * nt_per + i) * tile_n            # global first row of this tile
        is_full = (r0 + tile_n) <= n_rows

        @pl.when(is_full)
        def _():
            run(None)

        @pl.when(jnp.logical_not(is_full))
        def _():
            run(n_rows - r0)                      # <=0 for overflow tiles -> all zero
    else:
        run(None)

    # Single cross-sublane (XLU) reduce per (row-split, feature tile).
    @pl.when(i == nt_per - 1)
    def _():
        o_ref[...] = jnp.sum(acc_ref[...], axis=0, keepdims=True)


def sum_pooling(h: jax.Array, *, use_kernel: bool | None = None,
                tile_n: int | None = None, tile_d: int | None = None,
                row_splits: int | None = None) -> jax.Array:
    """Equivalent of SumPooling().forward(H): sum over axis 0 of a 2-D array."""
    n, d = h.shape
    itemsize = jnp.dtype(h.dtype).itemsize

    if use_kernel is None:
        use_kernel = n * d * itemsize >= _FAST_PATH_BYTES
    if not use_kernel or not jnp.issubdtype(h.dtype, jnp.floating):
        # KB-scale inputs (launch overhead >> work) and non-float dtypes.
        return jnp.sum(h, axis=0)

    multi_tc, vmem_cap = _tpu_info()
    per_buffer = min(16 * 2**20, max(2 * 2**20, vmem_cap // 8))
    vmem_limit = min(96 * 2**20, (vmem_cap * 3) // 4)

    pack = max(_SUBLANES, 32 // itemsize)          # rows per vreg for this dtype

    # Feature tile (generation-aware).
    td = tile_d if tile_d is not None else _pick_tile_d(d, itemsize, multi_tc)
    assert d % td == 0 and (td % _LANES == 0 or td == d)

    # Row tile purely from the per-buffer byte budget (no artificial cap); the
    # ragged tail is masked in-kernel, so no wrapper-side padding/copy of H.
    chunk_cap = max(pack, (_CHUNK_BYTES // (td * 4)) // pack * pack)
    if tile_n is not None:
        tn = _round_up(int(tile_n), pack)
        chunk = pack
        for c in range(min(chunk_cap, tn), pack - 1, -pack):
            if tn % c == 0:
                chunk = c
                break
    else:
        tn = max(pack, (per_buffer // (td * itemsize)) // pack * pack)
        tn = min(tn, _round_up(n, pack))
        chunk = min(chunk_cap, tn)
        tn = max(chunk, (tn // chunk) * chunk)

    nt_total = pl.cdiv(n, tn)
    d_tiles = d // td

    # Row split: on 2-TC parts with a single feature tile, give each core half
    # of the row tiles and add the two partial outputs in the wrapper.
    if row_splits is not None:
        split_n = max(1, int(row_splits))
    elif multi_tc and d_tiles < 2 and nt_total >= 2:
        split_n = 2
    else:
        split_n = 1
    nt_per = pl.cdiv(nt_total, split_n)

    may_be_partial = (n % tn != 0) or (nt_total % split_n != 0)
    num_chunks = tn // chunk
    unroll = num_chunks <= 8

    def in_index_map(s, j, i):
        # Clamp so the overflow tiles of the last row-split stay in bounds;
        # their contribution is masked to zero in the kernel.
        return (jnp.minimum(s * nt_per + i, nt_total - 1), j)

    block_bytes = tn * td * itemsize
    in_spec = pl.BlockSpec((tn, td), in_index_map)
    if block_bytes <= _SMALL_BLOCK_BYTES and nt_per >= 4:
        # Tiny blocks expose DMA issue latency; request a 3-deep pipeline.
        try:
            in_spec = pl.BlockSpec((tn, td), in_index_map,
                                   pipeline_mode=pl.Buffered(3))
        except TypeError:  # pipeline_mode unsupported -> default double buffer
            in_spec = pl.BlockSpec((tn, td), in_index_map)

    kernel = functools.partial(
        _sum_pool_kernel, n_rows=n, tile_n=tn, tile_d=td, chunk=chunk,
        nt_per=nt_per, may_be_partial=may_be_partial, unroll=unroll)

    out = pl.pallas_call(
        kernel,
        out_shape=jax.ShapeDtypeStruct((split_n, 1, d), jnp.float32),
        grid_spec=pltpu.PrefetchScalarGridSpec(
            num_scalar_prefetch=0,
            grid=(split_n, d_tiles, nt_per),
            in_specs=[in_spec],
            out_specs=pl.BlockSpec((None, 1, td), lambda s, j, i: (s, 0, j)),
            scratch_shapes=[pltpu.VMEM((_SUBLANES, td), jnp.float32)],
        ),
        compiler_params=pltpu.CompilerParams(
            dimension_semantics=("parallel", "parallel", "arbitrary"),
            vmem_limit_bytes=vmem_limit,
        ),
    )(h)

    # Combine the (at most 2) row-split partials and restore the input dtype.
    return jnp.sum(out, axis=(0, 1)).astype(h.dtype)


if __name__ == "__main__":
    key = jax.random.PRNGKey(0)
    k1, k2, k3, k4, k5 = jax.random.split(key, 5)

    # 1) Spec-sized example (seq N=8, hidden D=32); force the kernel path so
    #    the Pallas kernel itself is exercised despite the tiny size.
    H1 = jax.random.normal(k1, (8, 32), dtype=jnp.float32)
    out1 = jax.block_until_ready(sum_pooling(H1, use_kernel=True))
    ref1 = jnp.sum(H1, axis=0)
    assert out1.shape == ref1.shape == (32,)
    assert jnp.allclose(out1, ref1, atol=1e-5, rtol=1e-5)

    # 2) Larger f32 case through the kernel's normal (auto) path.
    H2 = jax.random.normal(k2, (1024, 128), dtype=jnp.float32)
    out2 = jax.block_until_ready(sum_pooling(H2))
    ref2 = jnp.sum(H2, axis=0)
    assert jnp.allclose(out2, ref2, atol=1e-3, rtol=1e-4)

    # 3) bf16, N not a multiple of the row tile: exercises in-kernel tail
    #    masking (no wrapper-side padding) and f32 scratch accumulation.
    H3 = jax.random.normal(k3, (300, 256), dtype=jnp.bfloat16)
    out3 = jax.block_until_ready(sum_pooling(H3))
    ref3 = jnp.sum(H3.astype(jnp.float32), axis=0)
    assert out3.dtype == jnp.bfloat16
    assert jnp.allclose(out3.astype(jnp.float32), ref3, atol=0.5, rtol=2e-2)

    # 4) Forced small tiles: multi feature-tile + multi row-tile grid, ragged
    #    tail masking, and the deep-pipelining (Buffered(3)) path.
    H4 = jax.random.normal(k4, (2500, 256), dtype=jnp.bfloat16)
    out4 = jax.block_until_ready(
        sum_pooling(H4, use_kernel=True, tile_n=512, tile_d=128))
    ref4 = jnp.sum(H4.astype(jnp.float32), axis=0)
    assert jnp.allclose(out4.astype(jnp.float32), ref4, atol=2.0, rtol=2e-2)

    # 5) Forced 2-way row split (the v7x path) on any hardware, including an
    #    overflowing last row tile on the second split (nt_total=5, nt_per=3).
    H5 = jax.random.normal(k5, (600, 128), dtype=jnp.float32)
    out5 = jax.block_until_ready(
        sum_pooling(H5, use_kernel=True, tile_n=128, row_splits=2))
    ref5 = jnp.sum(H5, axis=0)
    assert jnp.allclose(out5, ref5, atol=1e-3, rtol=1e-4)

    print("KERNEL_OK")
</pallas_src>

<mosaic_0001>
module attributes {stable_mosaic.version = 11 : i64} {
  func.func @_sum_pool_kernel(%arg0: i32, %arg1: i32, %arg2: i32, %arg3: memref<8x32xf32, #tpu.memory_space<vmem>>, %arg4: memref<1x1x32xf32, #tpu.memory_space<vmem>>, %arg5: memref<8x32xf32, #tpu.memory_space<vmem>>) attributes {dimension_semantics = [#tpu.dimension_semantics<parallel>, #tpu.dimension_semantics<parallel>, #tpu.dimension_semantics<arbitrary>], iteration_bounds = array<i64: 1, 1, 1>, scalar_prefetch = 0 : i64, scratch_operands = 1 : i64, tpu.core_type = #tpu.core_type<tc>, window_params = [{transform_indices = @transform_0, window_bounds = array<i64: 8, 32>}, {transform_indices = @transform_1, window_bounds = array<i64: 1, 1, 32>}]} {
    %c0_i32 = arith.constant 0 : i32
    %0 = arith.cmpi eq, %arg2, %c0_i32 : i32
    %1 = arith.extui %0 : i1 to i32
    %c0_i32_0 = arith.constant 0 : i32
    %2 = arith.cmpi ne, %1, %c0_i32_0 : i32
    scf.if %2 {
      %cst_8 = arith.constant 0.000000e+00 : f32
      %15 = vector.broadcast %cst_8 : f32 to vector<8x32xf32>
      %c0_9 = arith.constant 0 : index
      %c0_10 = arith.constant 0 : index
      %16 = vector.load %arg5[%c0_9, %c0_10] : memref<8x32xf32, #tpu.memory_space<vmem>>, vector<8x32xf32>
      tpu.vector_store %arg5[%c0_9, %c0_10], %15 {strides = array<i32>} : memref<8x32xf32, #tpu.memory_space<vmem>>, vector<8x32xf32>,
    } else {
    }
    %c0_i32_1 = arith.constant 0 : i32
    %c8_i32 = arith.constant 8 : i32
    %3 = arith.muli %c0_i32_1, %c8_i32 : i32
    %4 = tpu.assume_multiple %3, 8 : i32
    %5 = arith.index_cast %4 : i32 to index
    %c0 = arith.constant 0 : index
    %6 = vector.load %arg3[%5, %c0] : memref<8x32xf32, #tpu.memory_space<vmem>>, vector<8x32xf32>
    %c0_2 = arith.constant 0 : index
    %c0_3 = arith.constant 0 : index
    %7 = vector.load %arg5[%c0_2, %c0_3] : memref<8x32xf32, #tpu.memory_space<vmem>>, vector<8x32xf32>
    %8 = vector.shape_cast %6 : vector<8x32xf32> to vector<1x8x32xf32>
    %cst = arith.constant dense<0.000000e+00> : vector<8x32xf32>
    %9 = vector.multi_reduction <add>, %8, %cst [0] : vector<1x8x32xf32> to vector<8x32xf32>
    %10 = arith.addf %7, %9 : vector<8x32xf32>
    %c0_4 = arith.constant 0 : index
    %c0_5 = arith.constant 0 : index
    %11 = vector.load %arg5[%c0_4, %c0_5] : memref<8x32xf32, #tpu.memory_space<vmem>>, vector<8x32xf32>
    tpu.vector_store %arg5[%c0_4, %c0_5], %10 {strides = array<i32>} : memref<8x32xf32, #tpu.memory_space<vmem>>, vector<8x32xf32>,
    %c1_i32 = arith.constant 1 : i32
    %c0_i32_6 = arith.constant 0 : i32
    %12 = arith.cmpi eq, %arg2, %c0_i32_6 : i32
    %13 = arith.extui %12 : i1 to i32
    %c0_i32_7 = arith.constant 0 : i32
    %14 = arith.cmpi ne, %13, %c0_i32_7 : i32
    scf.if %14 {
      %c0_8 = arith.constant 0 : index
      %c0_9 = arith.constant 0 : index
      %15 = vector.load %arg5[%c0_8, %c0_9] : memref<8x32xf32, #tpu.memory_space<vmem>>, vector<8x32xf32>
      %cst_10 = arith.constant dense<0.000000e+00> : vector<32xf32>
      %16 = vector.multi_reduction <add>, %15, %cst_10 [0] : vector<8x32xf32> to vector<32xf32>
      %17 = vector.shape_cast %16 : vector<32xf32> to vector<1x32xf32>
      %c0_11 = arith.constant 0 : index
      %c0_12 = arith.constant 0 : index
      %c0_13 = arith.constant 0 : index
      %18 = vector.load %arg4[%c0_11, %c0_12, %c0_13] : memref<1x1x32xf32, #tpu.memory_space<vmem>>, vector<1x1x32xf32>
      %19 = vector.shape_cast %18 : vector<1x1x32xf32> to vector<1x32xf32>
      %20 = vector.shape_cast %17 : vector<1x32xf32> to vector<1x1x32xf32>
      tpu.vector_store %arg4[%c0_11, %c0_12, %c0_13], %20 {strides = array<i32>} : memref<1x1x32xf32, #tpu.memory_space<vmem>>, vector<1x1x32xf32>,
    } else {
    }
    return
  }
  func.func @transform_0(%arg0: i32, %arg1: i32, %arg2: i32) -> (i32, i32) {
    %c1_i32 = arith.constant 1 : i32
    %0 = arith.muli %arg0, %c1_i32 : i32
    %1 = arith.addi %0, %arg2 : i32
    %c0_i32 = arith.constant 0 : i32
    %2 = arith.minsi %1, %c0_i32 : i32
    %c0_i32_0 = arith.constant 0 : i32
    return %2, %arg1 : i32, i32
  }
  func.func @transform_1(%arg0: i32, %arg1: i32, %arg2: i32) -> (i32, i32, i32) {
    %c0_i32 = arith.constant 0 : i32
    %c0_i32_0 = arith.constant 0 : i32
    return %arg0, %c0_i32, %arg1 : i32, i32, i32
  }
}

</mosaic_0001>

<llo_original>
// kernel: tpu_custom_call.1
$region0: #{tpu_custom_call.1}
  #allocation0 [shape = 'u32[]', space=smem, size = 0x4, offset = 0x4, fixed_abs, tag = 'smem constant byte address 0x4 - core index']
  #allocation1 [shape = 'u32[144,128]{1,0:T(1,128)}', space=vmem, size = 0x12000, scoped, tag = 'internal scratch']
  #allocation2 [shape = 'f32[8,32]{1,0:T(8,128)}', space=vmem, size = 0x1000, scoped, tag = 'scratch operand']
  %s0 = inlined_call_operand.hbm [shape: f32[8,32], index: 0, kind: input, shape index: {}]
  %s1 = inlined_call_operand.hbm [shape: f32[1,1,32], index: 1, kind: output, shape index: {}]
  %s2 = sld [smem:[#allocation0]]
  $region26: #{tpu_custom_call.1} parent=0
    _
  %s4 = ssub.s32 1, %s2
  %s5 = scalar_select 0, %s4, %s2
  $region1: #{tpu_custom_call.1} parent=0
    #allocation3 [shape = 'u8[4096]{0}', space=vmem, size = 0x1000, scoped, tag = 'input window, operand 0, single buffered']
    #allocation4 [shape = 's32[1]{0}', space=sflag, size = 0x4, scoped, tag = 'scoped memory for tpu_custom_call.1']
    #allocation5 [shape = 's32[1]{0}', space=sflag, size = 0x4, scoped, tag = 'scoped memory for tpu_custom_call.1']
    #allocation6 [shape = 'u8[512]{0}', space=vmem, size = 0x400, scoped, tag = 'output window, operand 0, single buffered']
    %6 = vsyncpa [#allocation4], 0
    %7 = vsyncpa [#allocation5], 0
    // Predicated region
    $region2: #{tpu_custom_call.1} parent=1 // pred_check
      _
    $region3: #{tpu_custom_call.1} parent=1 // pred_check_branch
      %9 = sbr.rel (0) target = $region5
    $region4: #{tpu_custom_call.1} parent=1 // pred_region
      %s10 = sadd.s32 0, 0
      %p11 = scmp.lt.s32.totalorder %s10, 0
      %s12 = scalar_select %p11, %s10, 0
      %s14 = ssub.s32 128, 128
      %15 = vsyncadd [#allocation4], %s14
      %s16 = smul.addr %s12, 128
      %s17 = scalar_lea.hbm %s0, %s16
      %s19 = sshll.u32 [#allocation3], 4
      %s20 = int_to_ptr.vmem [resolvable:$true] %s19
      %22 = dma.hbm_to_vmem [thread:$0]  %s17, 128, %s20, [#allocation4]
    $region5: #{tpu_custom_call.1} parent=1 // pred_fallthru
      _
    // Predicated region
    $region6: #{tpu_custom_call.1} parent=1 // pred_check
      _
    $region7: #{tpu_custom_call.1} parent=1 // pred_check_branch
      %24 = sbr.rel (0) target = $region9
    $region8: #{tpu_custom_call.1} parent=1 // pred_region
      %25 = dma.done [#allocation4], 128
    $region9: #{tpu_custom_call.1} parent=1 // pred_fallthru
      _
    %s26 = sadd.s32 0, 0
    %p27 = scmp.lt.s32.totalorder %s26, 0
    %s28 = scalar_select %p27, %s26, 0
    %p29 = scmp.eq.s32.totalorder 0, 0
    // Predicated region
    $region10: #{tpu_custom_call.1} parent=1 // pred_check
      %p30 = pneg %p29
    $region11: #{tpu_custom_call.1} parent=1 // pred_check_branch
      %32 = sbr.rel (%p30) target = $region13
    $region12: #{tpu_custom_call.1} parent=1 // pred_region
      %vm33 = vcmask 261120
      %34 = vst.msk [vmem:[#allocation2] sm:$0xff] %vm33, 0.0
    $region13: #{tpu_custom_call.1} parent=1 // pred_fallthru
      _
    %v35 = vld [vmem:[#allocation3] sm:$0xff]
    %v36 = vld [vmem:[#allocation2] sm:$0xff]
    %v37 = vadd.f32 %v35, 0.0
    %v38 = vadd.f32 %v36, %v37
    %vm39 = vcmask 261120
    %40 = vst.msk [vmem:[#allocation2] sm:$0xff] %vm39, %v38
    // Predicated region
    $region14: #{tpu_custom_call.1} parent=1 // pred_check
      %p41 = pneg %p29
    $region15: #{tpu_custom_call.1} parent=1 // pred_check_branch
      %43 = sbr.rel (%p41) target = $region17
    $region16: #{tpu_custom_call.1} parent=1 // pred_region
      %v44 = vld [vmem:[#allocation2] sm:$0xff]
      %v45 = vsel %vm39, %v44, 0.0
      %v46 = vrot.slane %v45, 4
      %v47 = vadd.f32 %v45, %v46
      %v48 = vrot.slane %v47, 2
      %v49 = vadd.f32 %v47, %v48
      %v50 = vrot.slane %v49, 1
      %v51 = vadd.f32 %v49, %v50
      %vm52 = vcmask 253952
      %53 = vst.msk [vmem:[#allocation6] sm:$0x1] %vm52, %v51
    $region17: #{tpu_custom_call.1} parent=1 // pred_fallthru
      _
    // Predicated region
    $region18: #{tpu_custom_call.1} parent=1 // pred_check
      _
    $region19: #{tpu_custom_call.1} parent=1 // pred_check_branch
      %55 = sbr.rel (0) target = $region21
    $region20: #{tpu_custom_call.1} parent=1 // pred_region
      %s57 = ssub.s32 16, 16
      %58 = vsyncadd [#allocation5], %s57
      %s60 = sshll.u32 [#allocation6], 4
      %s61 = int_to_ptr.vmem [resolvable:$true] %s60
      %63 = dma.vmem_to_hbm [thread:$0]  %s61, 16, %s1, [#allocation5]
    $region21: #{tpu_custom_call.1} parent=1 // pred_fallthru
      _
    // Predicated region
    $region22: #{tpu_custom_call.1} parent=1 // pred_check
      _
    $region23: #{tpu_custom_call.1} parent=1 // pred_check_branch
      %65 = sbr.rel (0) target = $region25
    $region24: #{tpu_custom_call.1} parent=1 // pred_region
      %66 = dma.done [#allocation5], 16
    $region25: #{tpu_custom_call.1} parent=1 // pred_fallthru
      _
    %67 = vsyncpa [#allocation4], 1
    %68 = vsyncpa [#allocation5], 1

</llo_original>
